<compile_context>
chip_gen: v5e
topology: v5e:2x2
jax: 0.10.0
libtpu: 0.0.40
codegen_flags: <defaults>
</compile_context>

<pallas_src>
import jax
import jax.numpy as jnp
from jax import lax
from jax.experimental import pallas as pl
from jax.experimental.pallas import tpu as pltpu

# ---- problem sizes (small, CIFAR-like) ----
N, CIN, H, W = 2, 3, 16, 16
COUT = 16
KH = KW = 3
K = KH * KW * CIN            # 27  : fused contraction depth (channels x taps)
HW = H * W                   # 256 : per-image spatial axis
NHW = N * HW                 # 512 : lane-dense fused batch*spatial axis
BN_EPS = 1e-5


def conv_bn_relu_kernel(x_ref, w_ref, b_ref, o_ref):
    # x_ref: (K, N*HW) = (27, 512)  bf16 im2col, row k = c*9 + dy*3 + dx,
    #                                col = n*256 + (y*16 + x)
    # w_ref: (COUT, K) = (16, 27)   bf16 conv weight with BN scale folded in
    # b_ref: (COUT, 1)              f32 folded BN bias
    # o_ref: (N, COUT, HW)          f32 output (reshapes directly to NCHW)
    acc = jnp.dot(w_ref[...], x_ref[...],
                  preferred_element_type=jnp.float32)          # (16, 512), one MXU fill
    acc = jnp.maximum(acc + b_ref[...], 0.0)                   # f32 epilogue (v5e-safe)
    for n in range(N):                                         # static 128-aligned lane slices
        o_ref[n] = acc[:, n * HW:(n + 1) * HW].astype(o_ref.dtype)


@jax.jit
def resnet_tier7_forward(x_nchw, w_oihw, bn_gamma, bn_beta, bn_mean, bn_var):
    """conv3x3(3->16, stride1, pad1, no bias) -> BN(eval) -> ReLU, via Pallas."""
    # ---- layout glue (plain JAX): build im2col directly in bf16, K-major ----
    x_bf = x_nchw.astype(jnp.bfloat16)                               # cast before slicing
    x_pad = jnp.pad(x_bf, ((0, 0), (0, 0), (1, 1), (1, 1)))          # (N,3,18,18) bf16
    x_pad_c = jnp.transpose(x_pad, (1, 0, 2, 3))                     # (3,N,18,18), single tiny transpose
    taps = []
    for dy in range(KH):
        for dx in range(KW):
            taps.append(
                x_pad_c[:, :, dy:dy + H, dx:dx + W].reshape(CIN, 1, N, HW))
    # (CIN, 9, N, HW) -> (27, 512); k-order matches w.reshape(COUT, 27),
    # lane order is (n, hw) so kernel stores map straight back to NCHW.
    x_im2col = jnp.concatenate(taps, axis=1).reshape(K, NHW)

    # Fold BatchNorm (eval) into the conv weight + a per-channel bias.
    scale = bn_gamma / jnp.sqrt(bn_var + BN_EPS)                     # (COUT,)
    w2d = (w_oihw.reshape(COUT, K) * scale[:, None]).astype(jnp.bfloat16)
    bias = (bn_beta - bn_mean * scale).reshape(COUT, 1)              # (COUT, 1) f32

    flops = 2 * COUT * K * NHW                                       # ~442 KFLOPs
    bytes_accessed = (K * NHW * 2) + (COUT * K * 2) + (COUT * 4) + (N * COUT * HW * 4)

    out = pl.pallas_call(
        conv_bn_relu_kernel,
        out_shape=jax.ShapeDtypeStruct((N, COUT, HW), jnp.float32),
        in_specs=[
            pl.BlockSpec(memory_space=pltpu.MemorySpace.VMEM),
            pl.BlockSpec(memory_space=pltpu.MemorySpace.VMEM),
            pl.BlockSpec(memory_space=pltpu.MemorySpace.VMEM),
        ],
        out_specs=pl.BlockSpec(memory_space=pltpu.MemorySpace.VMEM),
        cost_estimate=pl.CostEstimate(flops=flops, transcendentals=0,
                                      bytes_accessed=bytes_accessed),
    )(x_im2col, w2d, bias)

    # (N, COUT, HW) is already channel-major -> direct reshape to NCHW.
    return out.reshape(N, COUT, H, W)


def reference_forward(x_nchw, w_oihw, bn_gamma, bn_beta, bn_mean, bn_var):
    y = lax.conv_general_dilated(
        x_nchw, w_oihw, window_strides=(1, 1), padding=((1, 1), (1, 1)),
        dimension_numbers=("NCHW", "OIHW", "NCHW"))
    scale = (bn_gamma / jnp.sqrt(bn_var + BN_EPS)).reshape(1, COUT, 1, 1)
    bias = (bn_beta - bn_mean * bn_gamma / jnp.sqrt(bn_var + BN_EPS)).reshape(
        1, COUT, 1, 1)
    return jnp.maximum(y * scale + bias, 0.0)


if __name__ == "__main__":
    key = jax.random.PRNGKey(0)
    k_x, k_w = jax.random.split(key)

    # input (NCHW, like PyTorch); conv1 has in_channels=3 per the module spec
    x = jax.random.normal(k_x, (N, CIN, H, W), dtype=jnp.float32)

    # conv1 weight: kaiming_normal_(mode='fan_out', nonlinearity='relu')
    fan_out = COUT * KH * KW
    std = (2.0 / fan_out) ** 0.5
    w = std * jax.random.normal(k_w, (COUT, CIN, KH, KW), dtype=jnp.float32)

    # BatchNorm2d(16) deterministic params / running stats
    gamma = jnp.ones((COUT,), jnp.float32)
    beta = jnp.zeros((COUT,), jnp.float32)
    running_mean = jnp.zeros((COUT,), jnp.float32)
    running_var = jnp.ones((COUT,), jnp.float32)

    out = resnet_tier7_forward(x, w, gamma, beta, running_mean, running_var)
    out = jax.block_until_ready(out)

    ref = reference_forward(x, w, gamma, beta, running_mean, running_var)
    assert out.shape == (N, COUT, H, W)
    assert jnp.allclose(out, ref, rtol=1e-2, atol=1e-2), "mismatch vs reference"

    print("KERNEL_OK")
</pallas_src>

<mosaic_0001>
module attributes {stable_mosaic.version = 11 : i64} {
  func.func @conv_bn_relu_kernel(%arg0: memref<27x512xbf16, #tpu.memory_space<vmem>>, %arg1: memref<16x27xbf16, #tpu.memory_space<vmem>>, %arg2: memref<16x1xf32, #tpu.memory_space<vmem>>, %arg3: memref<2x16x256xf32, #tpu.memory_space<vmem>>) attributes {dimension_semantics = [], scalar_prefetch = 0 : i64, scratch_operands = 0 : i64, tpu.core_type = #tpu.core_type<tc>} {
    %c0 = arith.constant 0 : index
    %c0_0 = arith.constant 0 : index
    %0 = vector.load %arg1[%c0, %c0_0] : memref<16x27xbf16, #tpu.memory_space<vmem>>, vector<16x27xbf16>
    %c0_1 = arith.constant 0 : index
    %c0_2 = arith.constant 0 : index
    %1 = vector.load %arg0[%c0_1, %c0_2] : memref<27x512xbf16, #tpu.memory_space<vmem>>, vector<27x512xbf16>
    %cst = arith.constant dense<0.000000e+00> : vector<16x512xf32>
    %2 = tpu.matmul %0, %1, %cst {dimension_numbers = #tpu.dot_dimension_numbers<[1], [0], [0], [1], [0, 0, 1, 1], [], []>} : vector<16x27xbf16>, vector<27x512xbf16>, vector<16x512xf32> -> vector<16x512xf32>
    %c0_3 = arith.constant 0 : index
    %c0_4 = arith.constant 0 : index
    %3 = vector.load %arg2[%c0_3, %c0_4] : memref<16x1xf32, #tpu.memory_space<vmem>>, vector<16x1xf32>
    %4 = vector.broadcast %3 : vector<16x1xf32> to vector<16x512xf32>
    %5 = arith.addf %2, %4 : vector<16x512xf32>
    %cst_5 = arith.constant 0.000000e+00 : f32
    %6 = vector.broadcast %cst_5 : f32 to vector<16x512xf32>
    %7 = arith.maximumf %5, %6 : vector<16x512xf32>
    %8 = vector.extract_strided_slice %7 {offsets = [0, 0], sizes = [16, 256], strides = [1, 1]} : vector<16x512xf32> to vector<16x256xf32>
    %c0_6 = arith.constant 0 : index
    %c0_7 = arith.constant 0 : index
    %c0_8 = arith.constant 0 : index
    %9 = vector.load %arg3[%c0_6, %c0_7, %c0_8] : memref<2x16x256xf32, #tpu.memory_space<vmem>>, vector<1x16x256xf32>
    %10 = vector.shape_cast %9 : vector<1x16x256xf32> to vector<16x256xf32>
    %11 = vector.shape_cast %8 : vector<16x256xf32> to vector<1x16x256xf32>
    tpu.vector_store %arg3[%c0_6, %c0_7, %c0_8], %11 {strides = array<i32>} : memref<2x16x256xf32, #tpu.memory_space<vmem>>, vector<1x16x256xf32>,
    %12 = vector.extract_strided_slice %7 {offsets = [0, 256], sizes = [16, 256], strides = [1, 1]} : vector<16x512xf32> to vector<16x256xf32>
    %c1 = arith.constant 1 : index
    %c0_9 = arith.constant 0 : index
    %c0_10 = arith.constant 0 : index
    %13 = vector.load %arg3[%c1, %c0_9, %c0_10] : memref<2x16x256xf32, #tpu.memory_space<vmem>>, vector<1x16x256xf32>
    %14 = vector.shape_cast %13 : vector<1x16x256xf32> to vector<16x256xf32>
    %15 = vector.shape_cast %12 : vector<16x256xf32> to vector<1x16x256xf32>
    tpu.vector_store %arg3[%c1, %c0_9, %c0_10], %15 {strides = array<i32>} : memref<2x16x256xf32, #tpu.memory_space<vmem>>, vector<1x16x256xf32>,
    return
  }
}

</mosaic_0001>

<llo_original>
// kernel: resnet_tier7_forward.1
$region0: #{resnet_tier7_forward.1}
  #allocation0 [shape = 'u32[]', space=smem, size = 0x4, offset = 0x4, fixed_abs, tag = 'smem constant byte address 0x4 - core index']
  #allocation1 [shape = 'u32[72,128]{1,0:T(1,128)}', space=vmem, size = 0x9000, scoped, tag = 'internal scratch']
  %s0 = inlined_call_operand.vmem [shape: bf16[27,512], index: 0, kind: input, shape index: {}]
  %s1 = inlined_call_operand.vmem [shape: bf16[16,27], index: 1, kind: input, shape index: {}]
  %s2 = inlined_call_operand.vmem [shape: f32[16,1], index: 2, kind: input, shape index: {}]
  %s3 = inlined_call_operand.vmem [shape: f32[2,16,256], index: 3, kind: output, shape index: {}]
  %s4 = sld [smem:[#allocation0]]
  $region22: #{resnet_tier7_forward.1} parent=0
    _
  %s6 = ssub.s32 1, %s4
  %s7 = scalar_select 0, %s6, %s4
  // Predicated region
  $region2: #{resnet_tier7_forward.1} parent=0 // pred_check
    _
  $region3: #{resnet_tier7_forward.1} parent=0 // pred_check_branch
    %9 = sbr.rel (0) target = $region5
  $region4: #{resnet_tier7_forward.1} parent=0 // pred_region
    _
  $region5: #{resnet_tier7_forward.1} parent=0 // pred_fallthru
    _
  // Predicated region
  $region6: #{resnet_tier7_forward.1} parent=0 // pred_check
    _
  $region7: #{resnet_tier7_forward.1} parent=0 // pred_check_branch
    %11 = sbr.rel (0) target = $region9
  $region8: #{resnet_tier7_forward.1} parent=0 // pred_region
    _
  $region9: #{resnet_tier7_forward.1} parent=0 // pred_fallthru
    _
  // Predicated region
  $region10: #{resnet_tier7_forward.1} parent=0 // pred_check
    _
  $region11: #{resnet_tier7_forward.1} parent=0 // pred_check_branch
    %13 = sbr.rel (0) target = $region13
  $region12: #{resnet_tier7_forward.1} parent=0 // pred_region
    _
  $region13: #{resnet_tier7_forward.1} parent=0 // pred_fallthru
    _
  %v15 = vld [vmem:[%s1] sm:$0xf]
  %v16 = vld [vmem:[%s1 + $0x4] sm:$0xf]
  %v17 = vld [vmem:[%s0] sm:$0xff]
  %v18 = vld [vmem:[%s0 + $0x8] sm:$0xff]
  %v19 = vld [vmem:[%s0 + $0x10] sm:$0xff]
  %v20 = vld [vmem:[%s0 + $0x18] sm:$0xff]
  %v21 = vld [vmem:[%s0 + $0x20] sm:$0xff]
  %v22 = vld [vmem:[%s0 + $0x28] sm:$0xff]
  %v23 = vld [vmem:[%s0 + $0x30] sm:$0x33]
  %v24 = vld [vmem:[%s0 + $0x38] sm:$0x33]
  %v25 = vld [vmem:[%s2] sm:$0xff]
  %v26 = vld [vmem:[%s2 + $0x8] sm:$0xff]
  %28 = vset.pattern.permute.xlu0 0
  %29 = vperm.xlu0 %28, %v25
  %v30 = vpop.permute.xlu0 %29
  %33 = vset.pattern.permute.xlu0 0
  %34 = vperm.xlu0 %33, %v26
  %v35 = vpop.permute.xlu0 %34
  %v39 = vunpack.c.l.b16 %v15
  %v40 = vunpack.c.l.b16 %v16
  %v41 = vpack.c.b16 %v40, %v39
  %v50 = vunpack.c.l.b16 %v17
  %v51 = vunpack.c.h.b16 %v17
  %v52 = vunpack.c.l.b16 %v18
  %v53 = vunpack.c.h.b16 %v18
  %v54 = vunpack.c.l.b16 %v19
  %v55 = vunpack.c.h.b16 %v19
  %v56 = vunpack.c.l.b16 %v20
  %v57 = vunpack.c.h.b16 %v20
  %v58 = vunpack.c.l.b16 %v21
  %v59 = vunpack.c.h.b16 %v21
  %v60 = vunpack.c.l.b16 %v22
  %v61 = vunpack.c.h.b16 %v22
  %v62 = vunpack.c.l.b16 %v23
  %v63 = vunpack.c.h.b16 %v23
  %v64 = vunpack.c.l.b16 %v24
  %v65 = vunpack.c.h.b16 %v24
  %v66 = vpack.c.b16 %v54, %v50
  %v67 = vpack.c.b16 %v55, %v51
  %v68 = vpack.c.b16 %v56, %v52
  %v69 = vpack.c.b16 %v57, %v53
  %v70 = vpack.c.b16 %v62, %v58
  %v71 = vpack.c.b16 %v63, %v59
  %v72 = vpack.c.b16 %v64, %v60
  %v73 = vpack.c.b16 %v65, %v61
  %vm78 = vcmask 220160
  %v80 = vsel %vm78, %v41, 0
  %vm82 = vcmask 1044480
  %vm83 = vcmask 1045504
  %v84 = vsel %vm82, 4294967295, 65535
  %v85 = vsel %vm83, %v84, 0
  %v87 = vand.u32 %v70, %v85
  %v90 = vand.u32 %v71, %v85
  %v93 = vand.u32 %v72, %v85
  %v96 = vand.u32 %v73, %v85
  %98 = vmatpush.bf16.msra.mxu0 0
  %99 = vmatpush.bf16.msra.mxu0 0
  %100 = vmatpush.bf16.msra.mxu0 0
  %101 = vmatpush.bf16.msra.mxu0 0
  %102 = vmatpush.bf16.msra.mxu0 0
  %103 = vmatpush.bf16.msra.mxu0 0
  %104 = vmatpush.bf16.msra.mxu0 %v87
  %105 = vmatpush.bf16.msra.mxu0 %v66
  %106 = vmatmul.bf16.gmra.mxu0 %v80
  %v107 = vpop.f32.mrf.mxu0
  %v108 = vadd.f32 %v30, %v107
  %v109 = vpop.f32.mrf.mxu0
  %v110 = vadd.f32 %v35, %v109
  %111 = vdwg.mxu0
  %112 = vmatpush.bf16.msra.mxu0 0
  %113 = vmatpush.bf16.msra.mxu0 0
  %114 = vmatpush.bf16.msra.mxu0 0
  %115 = vmatpush.bf16.msra.mxu0 0
  %116 = vmatpush.bf16.msra.mxu0 0
  %117 = vmatpush.bf16.msra.mxu0 0
  %118 = vmatpush.bf16.msra.mxu0 %v90
  %119 = vmatpush.bf16.msra.mxu0 %v67
  %120 = vmatmul.bf16.gmra.mxu0 %v80
  %v121 = vpop.f32.mrf.mxu0
  %v122 = vadd.f32 %v30, %v121
  %v123 = vpop.f32.mrf.mxu0
  %v124 = vadd.f32 %v35, %v123
  %125 = vdwg.mxu0
  %126 = vmatpush.bf16.msra.mxu0 0
  %127 = vmatpush.bf16.msra.mxu0 0
  %128 = vmatpush.bf16.msra.mxu0 0
  %129 = vmatpush.bf16.msra.mxu0 0
  %130 = vmatpush.bf16.msra.mxu0 0
  %131 = vmatpush.bf16.msra.mxu0 0
  %132 = vmatpush.bf16.msra.mxu0 %v93
  %133 = vmatpush.bf16.msra.mxu0 %v68
  %134 = vmatmul.bf16.gmra.mxu0 %v80
  %v135 = vpop.f32.mrf.mxu0
  %v136 = vadd.f32 %v30, %v135
  %v137 = vpop.f32.mrf.mxu0
  %v138 = vadd.f32 %v35, %v137
  %139 = vdwg.mxu0
  %140 = vmatpush.bf16.msra.mxu0 0
  %141 = vmatpush.bf16.msra.mxu0 0
  %142 = vmatpush.bf16.msra.mxu0 0
  %143 = vmatpush.bf16.msra.mxu0 0
  %144 = vmatpush.bf16.msra.mxu0 0
  %145 = vmatpush.bf16.msra.mxu0 0
  %146 = vmatpush.bf16.msra.mxu0 %v96
  %147 = vmatpush.bf16.msra.mxu0 %v69
  %148 = vmatmul.bf16.gmra.mxu0 %v80
  %v149 = vpop.f32.mrf.mxu0
  %v150 = vadd.f32 %v30, %v149
  %v151 = vpop.f32.mrf.mxu0
  %v152 = vadd.f32 %v35, %v151
  %153 = vdwg.mxu0
  %v154 = vmax.f32 %v108, 0.0
  %v155 = vmax.f32 %v122, 0.0
  %v156 = vmax.f32 %v136, 0.0
  %v157 = vmax.f32 %v150, 0.0
  %v158 = vmax.f32 %v110, 0.0
  %v159 = vmax.f32 %v124, 0.0
  %v160 = vmax.f32 %v138, 0.0
  %v161 = vmax.f32 %v152, 0.0
  %162 = vst [vmem:[%s3] sm:$0xff] %v154
  %163 = vst [vmem:[%s3 + $0x8] sm:$0xff] %v155
  %164 = vst [vmem:[%s3 + $0x10] sm:$0xff] %v158
  %165 = vst [vmem:[%s3 + $0x18] sm:$0xff] %v159
  %s166 = scalar_lea.vmem %s3, 32
  %167 = vst [vmem:[%s166] sm:$0xff] %v156
  %168 = vst [vmem:[%s166 + $0x8] sm:$0xff] %v157
  %169 = vst [vmem:[%s166 + $0x10] sm:$0xff] %v160
  %170 = vst [vmem:[%s166 + $0x18] sm:$0xff] %v161
  // Predicated region
  $region14: #{resnet_tier7_forward.1} parent=0 // pred_check
    _
  $region15: #{resnet_tier7_forward.1} parent=0 // pred_check_branch
    %172 = sbr.rel (0) target = $region17
  $region16: #{resnet_tier7_forward.1} parent=0 // pred_region
    _
  $region17: #{resnet_tier7_forward.1} parent=0 // pred_fallthru
    _
  // Predicated region
  $region18: #{resnet_tier7_forward.1} parent=0 // pred_check
    _
  $region19: #{resnet_tier7_forward.1} parent=0 // pred_check_branch
    %174 = sbr.rel (0) target = $region21
  $region20: #{resnet_tier7_forward.1} parent=0 // pred_region
    _
  $region21: #{resnet_tier7_forward.1} parent=0 // pred_fallthru
    _

</llo_original>
